<compile_context>
chip_gen: v5e
topology: v5e:2x2
jax: 0.10.0
libtpu: 0.0.40
codegen_flags: <defaults>
</compile_context>

<pallas_src>
import math
import functools

import jax
import jax.numpy as jnp
from jax.experimental import pallas as pl
from jax.experimental.pallas import tpu as pltpu


def _round_up(x, m):
    return ((x + m - 1) // m) * m


def _gcn_kernel(adj_ref, sup_ref, b_ref, out_ref, acc_ref):
    k = pl.program_id(1)

    @pl.when(k == 0)
    def _():
        acc_ref[...] = jnp.zeros_like(acc_ref)

    acc_ref[...] += jnp.dot(
        adj_ref[...], sup_ref[...], preferred_element_type=jnp.float32
    )

    # Bias add + store only once per output tile (last K step).
    @pl.when(k == pl.num_programs(1) - 1)
    def _():
        out_ref[...] = (acc_ref[...] + b_ref[...]).astype(out_ref.dtype)


@functools.partial(
    jax.jit, static_argnames=("row_tile", "col_tile", "use_bf16")
)
def graph_convolution(x, adj, weight, bias, *, row_tile=256, col_tile=512,
                      use_bf16=True):
    """GraphConvolution forward: adj @ (x @ weight) + bias."""
    n_nodes, in_features = x.shape
    out_features = weight.shape[1]
    assert adj.shape == (n_nodes, n_nodes)

    compute_dtype = jnp.bfloat16 if use_bf16 else jnp.float32

    # Hoisted tiny GEMM: support = x @ W   (N*F*O flops << N*N*O flops).
    support = jnp.dot(x, weight, preferred_element_type=jnp.float32)

    # ---- padding to hardware-friendly tile sizes --------------------------
    o_pad = _round_up(out_features, 128)                  # lane-dense output
    row_tile = min(row_tile, _round_up(n_nodes, 8))       # sublane multiple
    col_tile = min(col_tile, _round_up(n_nodes, 128))     # lane multiple
    n_row_pad = _round_up(n_nodes, row_tile)
    n_col_pad = _round_up(n_nodes, col_tile)

    adj_p = jnp.pad(
        adj, ((0, n_row_pad - n_nodes), (0, n_col_pad - n_nodes))
    ).astype(compute_dtype)
    sup_p = jnp.pad(
        support, ((0, n_col_pad - n_nodes), (0, o_pad - out_features))
    ).astype(compute_dtype)
    bias_p = jnp.pad(
        bias.reshape(1, out_features).astype(jnp.float32),
        ((0, 0), (0, o_pad - out_features)),
    )

    grid = (n_row_pad // row_tile, n_col_pad // col_tile)

    itemsize = jnp.dtype(compute_dtype).itemsize
    cost = pl.CostEstimate(
        flops=2 * n_row_pad * n_col_pad * o_pad,
        transcendentals=0,
        bytes_accessed=(
            n_row_pad * n_col_pad * itemsize            # adj stream
            + grid[0] * n_col_pad * o_pad * itemsize    # support per row tile
            + n_row_pad * o_pad * 4                     # output
        ),
    )

    out_padded = pl.pallas_call(
        _gcn_kernel,
        out_shape=jax.ShapeDtypeStruct((n_row_pad, o_pad), jnp.float32),
        grid_spec=pltpu.PrefetchScalarGridSpec(
            num_scalar_prefetch=0,
            grid=grid,
            in_specs=[
                # adj tile: (row_tile, col_tile)
                pl.BlockSpec((row_tile, col_tile), lambda i, k: (i, k)),
                # support K-slab: (col_tile, o_pad)
                pl.BlockSpec((col_tile, o_pad), lambda i, k: (k, 0)),
                # bias row
                pl.BlockSpec((1, o_pad), lambda i, k: (0, 0)),
            ],
            out_specs=pl.BlockSpec((row_tile, o_pad), lambda i, k: (i, 0)),
            scratch_shapes=[pltpu.VMEM((row_tile, o_pad), jnp.float32)],
        ),
        compiler_params=pltpu.CompilerParams(
            # Row tiles are independent -> parallel (megacore / v7x 2 TCs);
            # K axis carries the f32 accumulator -> arbitrary (sequential).
            dimension_semantics=("parallel", "arbitrary"),
        ),
        cost_estimate=cost,
    )(adj_p, sup_p, bias_p)

    return out_padded[:n_nodes, :out_features]


def init_gcn_params(key, in_features, out_features):
    """Deterministic init matching GraphConvolution.reset_parameters."""
    stdv = 1.0 / math.sqrt(out_features)
    k_w, k_b = jax.random.split(key)
    weight = jax.random.uniform(
        k_w, (in_features, out_features), jnp.float32, minval=-stdv, maxval=stdv
    )
    bias = jax.random.uniform(
        k_b, (out_features,), jnp.float32, minval=-stdv, maxval=stdv
    )
    return weight, bias


def _make_graph(key, n_nodes, in_features):
    k_x, k_adj = jax.random.split(key)
    x = jax.random.normal(k_x, (n_nodes, in_features), jnp.float32)
    # Symmetric, row-normalized dense adjacency (self-loops included).
    a = (jax.random.uniform(k_adj, (n_nodes, n_nodes)) < 0.1).astype(jnp.float32)
    a = jnp.maximum(a, a.T) + jnp.eye(n_nodes, dtype=jnp.float32)
    adj = a / jnp.sum(a, axis=1, keepdims=True)
    return x, adj


if __name__ == "__main__":
    key = jax.random.PRNGKey(0)

    # Case 1: small synthetic graph, 128 nodes, 32 feats -> 20 hidden units.
    k_g, k_p, key = jax.random.split(key, 3)
    x, adj = _make_graph(k_g, 128, 32)
    weight, bias = init_gcn_params(k_p, 32, 20)

    out = jax.block_until_ready(graph_convolution(x, adj, weight, bias))
    ref = adj @ (x @ weight) + bias
    assert out.shape == ref.shape
    # bf16 adj/support on the MXU -> loosened tolerance vs f32 reference.
    assert jnp.allclose(out, ref, atol=2e-2, rtol=2e-2), "mismatch vs reference (case 1)"

    # Case 2: non-tile-aligned sizes exercise the padding path (N=300, O=7).
    k_g2, k_p2, key = jax.random.split(key, 3)
    x2, adj2 = _make_graph(k_g2, 300, 48)
    weight2, bias2 = init_gcn_params(k_p2, 48, 7)

    out2 = jax.block_until_ready(graph_convolution(x2, adj2, weight2, bias2))
    ref2 = adj2 @ (x2 @ weight2) + bias2
    assert out2.shape == ref2.shape
    assert jnp.allclose(out2, ref2, atol=2e-2, rtol=2e-2), "mismatch vs reference (case 2)"

    print("KERNEL_OK")
</pallas_src>

<mosaic_0001>
module attributes {stable_mosaic.version = 11 : i64} {
  func.func @_gcn_kernel(%arg0: i32, %arg1: i32, %arg2: memref<128x128xbf16, #tpu.memory_space<vmem>>, %arg3: memref<128x128xbf16, #tpu.memory_space<vmem>>, %arg4: memref<1x128xf32, #tpu.memory_space<vmem>>, %arg5: memref<128x128xf32, #tpu.memory_space<vmem>>, %arg6: memref<128x128xf32, #tpu.memory_space<vmem>>) attributes {dimension_semantics = [#tpu.dimension_semantics<parallel>, #tpu.dimension_semantics<arbitrary>], iteration_bounds = array<i64: 1, 1>, scalar_prefetch = 0 : i64, scratch_operands = 1 : i64, tpu.core_type = #tpu.core_type<tc>, window_params = [{transform_indices = @transform_0, window_bounds = array<i64: 128, 128>}, {transform_indices = @transform_1, window_bounds = array<i64: 128, 128>}, {pipeline_mode = #tpu.pipeline_mode<synchronous>, transform_indices = @transform_2, window_bounds = array<i64: 1, 128>}, {transform_indices = @transform_3, window_bounds = array<i64: 128, 128>}]} {
    %c0_i32 = arith.constant 0 : i32
    %0 = arith.cmpi eq, %arg1, %c0_i32 : i32
    %1 = arith.extui %0 : i1 to i32
    %c0_i32_0 = arith.constant 0 : i32
    %2 = arith.cmpi ne, %1, %c0_i32_0 : i32
    scf.if %2 {
      %cst_10 = arith.constant 0.000000e+00 : f32
      %12 = vector.broadcast %cst_10 : f32 to vector<128x128xf32>
      %c0_11 = arith.constant 0 : index
      %c0_12 = arith.constant 0 : index
      %13 = vector.load %arg6[%c0_11, %c0_12] : memref<128x128xf32, #tpu.memory_space<vmem>>, vector<128x128xf32>
      tpu.vector_store %arg6[%c0_11, %c0_12], %12 {strides = array<i32>} : memref<128x128xf32, #tpu.memory_space<vmem>>, vector<128x128xf32>,
    } else {
    }
    %c0 = arith.constant 0 : index
    %c0_1 = arith.constant 0 : index
    %3 = vector.load %arg6[%c0, %c0_1] : memref<128x128xf32, #tpu.memory_space<vmem>>, vector<128x128xf32>
    %c0_2 = arith.constant 0 : index
    %c0_3 = arith.constant 0 : index
    %4 = vector.load %arg2[%c0_2, %c0_3] : memref<128x128xbf16, #tpu.memory_space<vmem>>, vector<128x128xbf16>
    %c0_4 = arith.constant 0 : index
    %c0_5 = arith.constant 0 : index
    %5 = vector.load %arg3[%c0_4, %c0_5] : memref<128x128xbf16, #tpu.memory_space<vmem>>, vector<128x128xbf16>
    %cst = arith.constant dense<0.000000e+00> : vector<128x128xf32>
    %6 = tpu.matmul %4, %5, %cst {dimension_numbers = #tpu.dot_dimension_numbers<[1], [0], [0], [1], [0, 0, 1, 1], [], []>} : vector<128x128xbf16>, vector<128x128xbf16>, vector<128x128xf32> -> vector<128x128xf32>
    %7 = arith.addf %3, %6 : vector<128x128xf32>
    %c0_6 = arith.constant 0 : index
    %c0_7 = arith.constant 0 : index
    %8 = vector.load %arg6[%c0_6, %c0_7] : memref<128x128xf32, #tpu.memory_space<vmem>>, vector<128x128xf32>
    tpu.vector_store %arg6[%c0_6, %c0_7], %7 {strides = array<i32>} : memref<128x128xf32, #tpu.memory_space<vmem>>, vector<128x128xf32>,
    %c0_i32_8 = arith.constant 0 : i32
    %9 = arith.cmpi eq, %arg1, %c0_i32_8 : i32
    %10 = arith.extui %9 : i1 to i32
    %c0_i32_9 = arith.constant 0 : i32
    %11 = arith.cmpi ne, %10, %c0_i32_9 : i32
    scf.if %11 {
      %c0_10 = arith.constant 0 : index
      %c0_11 = arith.constant 0 : index
      %12 = vector.load %arg6[%c0_10, %c0_11] : memref<128x128xf32, #tpu.memory_space<vmem>>, vector<128x128xf32>
      %c0_12 = arith.constant 0 : index
      %c0_13 = arith.constant 0 : index
      %13 = vector.load %arg4[%c0_12, %c0_13] : memref<1x128xf32, #tpu.memory_space<vmem>>, vector<1x128xf32>
      %14 = vector.broadcast %13 : vector<1x128xf32> to vector<128x128xf32>
      %15 = arith.addf %12, %14 : vector<128x128xf32>
      %c0_14 = arith.constant 0 : index
      %c0_15 = arith.constant 0 : index
      %16 = vector.load %arg5[%c0_14, %c0_15] : memref<128x128xf32, #tpu.memory_space<vmem>>, vector<128x128xf32>
      tpu.vector_store %arg5[%c0_14, %c0_15], %15 {strides = array<i32>} : memref<128x128xf32, #tpu.memory_space<vmem>>, vector<128x128xf32>,
    } else {
    }
    return
  }
  func.func @transform_0(%arg0: i32, %arg1: i32) -> (i32, i32) {
    %c0_i32 = arith.constant 0 : i32
    return %arg0, %arg1 : i32, i32
  }
  func.func @transform_1(%arg0: i32, %arg1: i32) -> (i32, i32) {
    %c0_i32 = arith.constant 0 : i32
    %c0_i32_0 = arith.constant 0 : i32
    return %arg1, %c0_i32 : i32, i32
  }
  func.func @transform_2(%arg0: i32, %arg1: i32) -> (i32, i32) {
    %c0_i32 = arith.constant 0 : i32
    %c0_i32_0 = arith.constant 0 : i32
    %c0_i32_1 = arith.constant 0 : i32
    return %c0_i32, %c0_i32_0 : i32, i32
  }
  func.func @transform_3(%arg0: i32, %arg1: i32) -> (i32, i32) {
    %c0_i32 = arith.constant 0 : i32
    %c0_i32_0 = arith.constant 0 : i32
    return %arg0, %c0_i32 : i32, i32
  }
}

</mosaic_0001>

<llo_original>
// kernel: graph_convolution.1
$region0: #{graph_convolution.1}
  #allocation0 [shape = 'u32[]', space=smem, size = 0x4, offset = 0x4, fixed_abs, tag = 'smem constant byte address 0x4 - core index']
  #allocation1 [shape = 'u32[72,128]{1,0:T(1,128)}', space=vmem, size = 0x9000, scoped, tag = 'internal scratch']
  #allocation2 [shape = 'f32[128,128]{1,0:T(8,128)}', space=vmem, size = 0x10000, scoped, tag = 'scratch operand']
  %s0 = inlined_call_operand.vmem [shape: bf16[128,128], index: 0, kind: input, shape index: {}]
  %s1 = inlined_call_operand.vmem [shape: bf16[128,128], index: 1, kind: input, shape index: {}]
  %s2 = inlined_call_operand.vmem [shape: f32[1,128], index: 2, kind: input, shape index: {}]
  %s3 = inlined_call_operand.vmem [shape: f32[128,128], index: 3, kind: output, shape index: {}]
  %s4 = sld [smem:[#allocation0]]
  $region30: #{graph_convolution.1} parent=0
    _
  %s6 = ssub.s32 1, %s4
  %s7 = scalar_select 0, %s6, %s4
  // Predicated region
  $region2: #{graph_convolution.1} parent=0 // pred_check
    _
  $region3: #{graph_convolution.1} parent=0 // pred_check_branch
    %9 = sbr.rel (0) target = $region5
  $region4: #{graph_convolution.1} parent=0 // pred_region
    _
  $region5: #{graph_convolution.1} parent=0 // pred_fallthru
    _
  // Predicated region
  $region6: #{graph_convolution.1} parent=0 // pred_check
    _
  $region7: #{graph_convolution.1} parent=0 // pred_check_branch
    %11 = sbr.rel (0) target = $region9
  $region8: #{graph_convolution.1} parent=0 // pred_region
    _
  $region9: #{graph_convolution.1} parent=0 // pred_fallthru
    _
  // Predicated region
  $region10: #{graph_convolution.1} parent=0 // pred_check
    _
  $region11: #{graph_convolution.1} parent=0 // pred_check_branch
    %13 = sbr.rel (0) target = $region13
  $region12: #{graph_convolution.1} parent=0 // pred_region
    _
  $region13: #{graph_convolution.1} parent=0 // pred_fallthru
    _
  %p14 = scmp.eq.s32.totalorder 0, 0
  // Predicated region
  $region14: #{graph_convolution.1} parent=0 // pred_check
    %p15 = pneg %p14
  $region15: #{graph_convolution.1} parent=0 // pred_check_branch
    %17 = sbr.rel (%p15) target = $region17
  $region16: #{graph_convolution.1} parent=0 // pred_region
    %18 = vst [vmem:[#allocation2] sm:$0xff] 0.0
    %19 = vst [vmem:[#allocation2 + $0x8] sm:$0xff] 0.0
    %20 = vst [vmem:[#allocation2 + $0x10] sm:$0xff] 0.0
    %21 = vst [vmem:[#allocation2 + $0x18] sm:$0xff] 0.0
    %22 = vst [vmem:[#allocation2 + $0x20] sm:$0xff] 0.0
    %23 = vst [vmem:[#allocation2 + $0x28] sm:$0xff] 0.0
    %24 = vst [vmem:[#allocation2 + $0x30] sm:$0xff] 0.0
    %25 = vst [vmem:[#allocation2 + $0x38] sm:$0xff] 0.0
    %26 = vst [vmem:[#allocation2 + $0x40] sm:$0xff] 0.0
    %27 = vst [vmem:[#allocation2 + $0x48] sm:$0xff] 0.0
    %28 = vst [vmem:[#allocation2 + $0x50] sm:$0xff] 0.0
    %29 = vst [vmem:[#allocation2 + $0x58] sm:$0xff] 0.0
    %30 = vst [vmem:[#allocation2 + $0x60] sm:$0xff] 0.0
    %31 = vst [vmem:[#allocation2 + $0x68] sm:$0xff] 0.0
    %32 = vst [vmem:[#allocation2 + $0x70] sm:$0xff] 0.0
    %33 = vst [vmem:[#allocation2 + $0x78] sm:$0xff] 0.0
  $region17: #{graph_convolution.1} parent=0 // pred_fallthru
    _
  %v34 = vld [vmem:[#allocation2] sm:$0xff]
  %v35 = vld [vmem:[#allocation2 + $0x8] sm:$0xff]
  %v36 = vld [vmem:[#allocation2 + $0x10] sm:$0xff]
  %v37 = vld [vmem:[#allocation2 + $0x18] sm:$0xff]
  %v38 = vld [vmem:[#allocation2 + $0x20] sm:$0xff]
  %v39 = vld [vmem:[#allocation2 + $0x28] sm:$0xff]
  %v40 = vld [vmem:[#allocation2 + $0x30] sm:$0xff]
  %v41 = vld [vmem:[#allocation2 + $0x38] sm:$0xff]
  %v42 = vld [vmem:[#allocation2 + $0x40] sm:$0xff]
  %v43 = vld [vmem:[#allocation2 + $0x48] sm:$0xff]
  %v44 = vld [vmem:[#allocation2 + $0x50] sm:$0xff]
  %v45 = vld [vmem:[#allocation2 + $0x58] sm:$0xff]
  %v46 = vld [vmem:[#allocation2 + $0x60] sm:$0xff]
  %v47 = vld [vmem:[#allocation2 + $0x68] sm:$0xff]
  %v48 = vld [vmem:[#allocation2 + $0x70] sm:$0xff]
  %v49 = vld [vmem:[#allocation2 + $0x78] sm:$0xff]
  %v50 = vld [vmem:[%s0] sm:$0xf]
  %v51 = vld [vmem:[%s0 + $0x4] sm:$0xf]
  %v52 = vld [vmem:[%s0 + $0x8] sm:$0xf]
  %v53 = vld [vmem:[%s0 + $0xc] sm:$0xf]
  %v54 = vld [vmem:[%s0 + $0x10] sm:$0xf]
  %v55 = vld [vmem:[%s0 + $0x14] sm:$0xf]
  %v56 = vld [vmem:[%s0 + $0x18] sm:$0xf]
  %v57 = vld [vmem:[%s0 + $0x1c] sm:$0xf]
  %v58 = vld [vmem:[%s0 + $0x20] sm:$0xf]
  %v59 = vld [vmem:[%s0 + $0x24] sm:$0xf]
  %v60 = vld [vmem:[%s0 + $0x28] sm:$0xf]
  %v61 = vld [vmem:[%s0 + $0x2c] sm:$0xf]
  %v62 = vld [vmem:[%s0 + $0x30] sm:$0xf]
  %v63 = vld [vmem:[%s0 + $0x34] sm:$0xf]
  %v64 = vld [vmem:[%s0 + $0x38] sm:$0xf]
  %v65 = vld [vmem:[%s0 + $0x3c] sm:$0xf]
  %v66 = vld [vmem:[%s1] sm:$0xf]
  %v67 = vld [vmem:[%s1 + $0x4] sm:$0xf]
  %v68 = vld [vmem:[%s1 + $0x8] sm:$0xf]
  %v69 = vld [vmem:[%s1 + $0xc] sm:$0xf]
  %v70 = vld [vmem:[%s1 + $0x10] sm:$0xf]
  %v71 = vld [vmem:[%s1 + $0x14] sm:$0xf]
  %v72 = vld [vmem:[%s1 + $0x18] sm:$0xf]
  %v73 = vld [vmem:[%s1 + $0x1c] sm:$0xf]
  %v74 = vld [vmem:[%s1 + $0x20] sm:$0xf]
  %v75 = vld [vmem:[%s1 + $0x24] sm:$0xf]
  %v76 = vld [vmem:[%s1 + $0x28] sm:$0xf]
  %v77 = vld [vmem:[%s1 + $0x2c] sm:$0xf]
  %v78 = vld [vmem:[%s1 + $0x30] sm:$0xf]
  %v79 = vld [vmem:[%s1 + $0x34] sm:$0xf]
  %v80 = vld [vmem:[%s1 + $0x38] sm:$0xf]
  %v81 = vld [vmem:[%s1 + $0x3c] sm:$0xf]
  %v98 = vunpack.c.l.b16 %v50
  %v99 = vunpack.c.l.b16 %v51
  %v100 = vunpack.c.l.b16 %v52
  %v101 = vunpack.c.l.b16 %v53
  %v102 = vunpack.c.l.b16 %v54
  %v103 = vunpack.c.l.b16 %v55
  %v104 = vunpack.c.l.b16 %v56
  %v105 = vunpack.c.l.b16 %v57
  %v106 = vunpack.c.l.b16 %v58
  %v107 = vunpack.c.l.b16 %v59
  %v108 = vunpack.c.l.b16 %v60
  %v109 = vunpack.c.l.b16 %v61
  %v110 = vunpack.c.l.b16 %v62
  %v111 = vunpack.c.l.b16 %v63
  %v112 = vunpack.c.l.b16 %v64
  %v113 = vunpack.c.l.b16 %v65
  %v114 = vpack.c.b16 %v99, %v98
  %v115 = vpack.c.b16 %v101, %v100
  %v116 = vpack.c.b16 %v103, %v102
  %v117 = vpack.c.b16 %v105, %v104
  %v118 = vpack.c.b16 %v107, %v106
  %v119 = vpack.c.b16 %v109, %v108
  %v120 = vpack.c.b16 %v111, %v110
  %v121 = vpack.c.b16 %v113, %v112
  %v146 = vunpack.c.l.b16 %v66
  %v147 = vunpack.c.l.b16 %v67
  %v148 = vunpack.c.l.b16 %v68
  %v149 = vunpack.c.l.b16 %v69
  %v150 = vunpack.c.l.b16 %v70
  %v151 = vunpack.c.l.b16 %v71
  %v152 = vunpack.c.l.b16 %v72
  %v153 = vunpack.c.l.b16 %v73
  %v154 = vunpack.c.l.b16 %v74
  %v155 = vunpack.c.l.b16 %v75
  %v156 = vunpack.c.l.b16 %v76
  %v157 = vunpack.c.l.b16 %v77
  %v158 = vunpack.c.l.b16 %v78
  %v159 = vunpack.c.l.b16 %v79
  %v160 = vunpack.c.l.b16 %v80
  %v161 = vunpack.c.l.b16 %v81
  %v162 = vpack.c.b16 %v147, %v146
  %v163 = vpack.c.b16 %v149, %v148
  %v164 = vpack.c.b16 %v151, %v150
  %v165 = vpack.c.b16 %v153, %v152
  %v166 = vpack.c.b16 %v155, %v154
  %v167 = vpack.c.b16 %v157, %v156
  %v168 = vpack.c.b16 %v159, %v158
  %v169 = vpack.c.b16 %v161, %v160
  %178 = vmatpush.bf16.msra.mxu0 %v169
  %179 = vmatpush.bf16.msra.mxu0 %v168
  %180 = vmatpush.bf16.msra.mxu0 %v167
  %181 = vmatpush.bf16.msra.mxu0 %v166
  %182 = vmatpush.bf16.msra.mxu0 %v165
  %183 = vmatpush.bf16.msra.mxu0 %v164
  %184 = vmatpush.bf16.msra.mxu0 %v163
  %185 = vmatpush.bf16.msra.mxu0 %v162
  %186 = vmatmul.bf16.gmra.mxu0 %v114
  %v187 = vpop.f32.mrf.mxu0
  %v188 = vadd.f32 0.0, %v187
  %v189 = vpop.f32.mrf.mxu0
  %v190 = vadd.f32 0.0, %v189
  %191 = vmatmul.bf16.gmra.mxu0 %v115
  %v192 = vpop.f32.mrf.mxu0
  %v193 = vadd.f32 0.0, %v192
  %v194 = vpop.f32.mrf.mxu0
  %v195 = vadd.f32 0.0, %v194
  %196 = vmatmul.bf16.gmra.mxu0 %v116
  %v197 = vpop.f32.mrf.mxu0
  %v198 = vadd.f32 0.0, %v197
  %v199 = vpop.f32.mrf.mxu0
  %v200 = vadd.f32 0.0, %v199
  %201 = vmatmul.bf16.gmra.mxu0 %v117
  %v202 = vpop.f32.mrf.mxu0
  %v203 = vadd.f32 0.0, %v202
  %v204 = vpop.f32.mrf.mxu0
  %v205 = vadd.f32 0.0, %v204
  %206 = vmatmul.bf16.gmra.mxu0 %v118
  %v207 = vpop.f32.mrf.mxu0
  %v208 = vadd.f32 0.0, %v207
  %v209 = vpop.f32.mrf.mxu0
  %v210 = vadd.f32 0.0, %v209
  %211 = vmatmul.bf16.gmra.mxu0 %v119
  %v212 = vpop.f32.mrf.mxu0
  %v213 = vadd.f32 0.0, %v212
  %v214 = vpop.f32.mrf.mxu0
  %v215 = vadd.f32 0.0, %v214
  %216 = vmatmul.bf16.gmra.mxu0 %v120
  %v217 = vpop.f32.mrf.mxu0
  %v218 = vadd.f32 0.0, %v217
  %v219 = vpop.f32.mrf.mxu0
  %v220 = vadd.f32 0.0, %v219
  %221 = vmatmul.bf16.gmra.mxu0 %v121
  %v222 = vpop.f32.mrf.mxu0
  %v223 = vadd.f32 0.0, %v222
  %v224 = vpop.f32.mrf.mxu0
  %v225 = vadd.f32 0.0, %v224
  %226 = vdwg.mxu0
  %v227 = vadd.f32 %v34, %v188
  %v228 = vadd.f32 %v35, %v190
  %v229 = vadd.f32 %v36, %v193
  %v230 = vadd.f32 %v37, %v195
  %v231 = vadd.f32 %v38, %v198
  %v232 = vadd.f32 %v39, %v200
  %v233 = vadd.f32 %v40, %v203
  %v234 = vadd.f32 %v41, %v205
  %v235 = vadd.f32 %v42, %v208
  %v236 = vadd.f32 %v43, %v210
  %v237 = vadd.f32 %v44, %v213
  %v238 = vadd.f32 %v45, %v215
  %v239 = vadd.f32 %v46, %v218
  %v240 = vadd.f32 %v47, %v220
  %v241 = vadd.f32 %v48, %v223
  %v242 = vadd.f32 %v49, %v225
  %243 = vst [vmem:[#allocation2] sm:$0xff] %v227
  %244 = vst [vmem:[#allocation2 + $0x8] sm:$0xff] %v228
  %245 = vst [vmem:[#allocation2 + $0x10] sm:$0xff] %v229
  %246 = vst [vmem:[#allocation2 + $0x18] sm:$0xff] %v230
  %247 = vst [vmem:[#allocation2 + $0x20] sm:$0xff] %v231
  %248 = vst [vmem:[#allocation2 + $0x28] sm:$0xff] %v232
  %249 = vst [vmem:[#allocation2 + $0x30] sm:$0xff] %v233
  %250 = vst [vmem:[#allocation2 + $0x38] sm:$0xff] %v234
  %251 = vst [vmem:[#allocation2 + $0x40] sm:$0xff] %v235
  %252 = vst [vmem:[#allocation2 + $0x48] sm:$0xff] %v236
  %253 = vst [vmem:[#allocation2 + $0x50] sm:$0xff] %v237
  %254 = vst [vmem:[#allocation2 + $0x58] sm:$0xff] %v238
  %255 = vst [vmem:[#allocation2 + $0x60] sm:$0xff] %v239
  %256 = vst [vmem:[#allocation2 + $0x68] sm:$0xff] %v240
  %257 = vst [vmem:[#allocation2 + $0x70] sm:$0xff] %v241
  %258 = vst [vmem:[#allocation2 + $0x78] sm:$0xff] %v242
  // Predicated region
  $region18: #{graph_convolution.1} parent=0 // pred_check
    %p259 = pneg %p14
  $region19: #{graph_convolution.1} parent=0 // pred_check_branch
    %261 = sbr.rel (%p259) target = $region21
  $region20: #{graph_convolution.1} parent=0 // pred_region
    %v262 = vld [vmem:[#allocation2] sm:$0xff]
    %v263 = vld [vmem:[#allocation2 + $0x8] sm:$0xff]
    %v264 = vld [vmem:[#allocation2 + $0x10] sm:$0xff]
    %v265 = vld [vmem:[#allocation2 + $0x18] sm:$0xff]
    %v266 = vld [vmem:[#allocation2 + $0x20] sm:$0xff]
    %v267 = vld [vmem:[#allocation2 + $0x28] sm:$0xff]
    %v268 = vld [vmem:[#allocation2 + $0x30] sm:$0xff]
    %v269 = vld [vmem:[#allocation2 + $0x38] sm:$0xff]
    %v270 = vld [vmem:[#allocation2 + $0x40] sm:$0xff]
    %v271 = vld [vmem:[#allocation2 + $0x48] sm:$0xff]
    %v272 = vld [vmem:[#allocation2 + $0x50] sm:$0xff]
    %v273 = vld [vmem:[#allocation2 + $0x58] sm:$0xff]
    %v274 = vld [vmem:[#allocation2 + $0x60] sm:$0xff]
    %v275 = vld [vmem:[#allocation2 + $0x68] sm:$0xff]
    %v276 = vld [vmem:[#allocation2 + $0x70] sm:$0xff]
    %v277 = vld [vmem:[#allocation2 + $0x78] sm:$0xff]
    %v278 = vld [vmem:[%s2] sm:$0x1]
    %v280 = vperm.slane %v278, 0
    %v282 = vadd.f32 %v262, %v280
    %v283 = vadd.f32 %v263, %v280
    %v284 = vadd.f32 %v264, %v280
    %v285 = vadd.f32 %v265, %v280
    %v286 = vadd.f32 %v266, %v280
    %v287 = vadd.f32 %v267, %v280
    %v288 = vadd.f32 %v268, %v280
    %v289 = vadd.f32 %v269, %v280
    %v290 = vadd.f32 %v270, %v280
    %v291 = vadd.f32 %v271, %v280
    %v292 = vadd.f32 %v272, %v280
    %v293 = vadd.f32 %v273, %v280
    %v294 = vadd.f32 %v274, %v280
    %v295 = vadd.f32 %v275, %v280
    %v296 = vadd.f32 %v276, %v280
    %v297 = vadd.f32 %v277, %v280
    %298 = vst [vmem:[%s3] sm:$0xff] %v282
    %299 = vst [vmem:[%s3 + $0x8] sm:$0xff] %v283
    %300 = vst [vmem:[%s3 + $0x10] sm:$0xff] %v284
    %301 = vst [vmem:[%s3 + $0x18] sm:$0xff] %v285
    %302 = vst [vmem:[%s3 + $0x20] sm:$0xff] %v286
    %303 = vst [vmem:[%s3 + $0x28] sm:$0xff] %v287
    %304 = vst [vmem:[%s3 + $0x30] sm:$0xff] %v288
    %305 = vst [vmem:[%s3 + $0x38] sm:$0xff] %v289
    %306 = vst [vmem:[%s3 + $0x40] sm:$0xff] %v290
    %307 = vst [vmem:[%s3 + $0x48] sm:$0xff] %v291
    %308 = vst [vmem:[%s3 + $0x50] sm:$0xff] %v292
    %309 = vst [vmem:[%s3 + $0x58] sm:$0xff] %v293
    %310 = vst [vmem:[%s3 + $0x60] sm:$0xff] %v294
    %311 = vst [vmem:[%s3 + $0x68] sm:$0xff] %v295
    %312 = vst [vmem:[%s3 + $0x70] sm:$0xff] %v296
    %313 = vst [vmem:[%s3 + $0x78] sm:$0xff] %v297
  $region21: #{graph_convolution.1} parent=0 // pred_fallthru
    _
  // Predicated region
  $region22: #{graph_convolution.1} parent=0 // pred_check
    _
  $region23: #{graph_convolution.1} parent=0 // pred_check_branch
    %315 = sbr.rel (0) target = $region25
  $region24: #{graph_convolution.1} parent=0 // pred_region
    _
  $region25: #{graph_convolution.1} parent=0 // pred_fallthru
    _
  // Predicated region
  $region26: #{graph_convolution.1} parent=0 // pred_check
    _
  $region27: #{graph_convolution.1} parent=0 // pred_check_branch
    %317 = sbr.rel (0) target = $region29
  $region28: #{graph_convolution.1} parent=0 // pred_region
    _
  $region29: #{graph_convolution.1} parent=0 // pred_fallthru
    _

</llo_original>
